<compile_context>
chip_gen: v6e
topology: v6e:2x2x1
jax: 0.10.0
libtpu: 0.0.40
codegen_flags: <defaults>
</compile_context>

<pallas_src>
import jax
import jax.numpy as jnp
from jax.experimental import pallas as pl
from jax.experimental.pallas import tpu as pltpu

_MiB = 1024 * 1024


# ---------------------------------------------------------------------------
# chip-aware sizing helpers
# ---------------------------------------------------------------------------
def _vmem_capacity_bytes():
    """Physical VMEM per TensorCore; conservative 64 MiB default (v7x floor)."""
    try:
        info = pltpu.get_tpu_info()
        for attr in ("vmem_capacity_bytes", "vmem_size_bytes", "vmem_bytes"):
            v = getattr(info, attr, None)
            if v:
                return int(v)
    except Exception:
        pass
    return 64 * _MiB


def _num_tensorcores():
    """TensorCores per chip (2 on v7x-style megacore parts, else 1)."""
    try:
        dev = jax.devices()[0]
        nc = getattr(dev, "num_cores", None)
        if nc:
            return int(nc)
        kind = dev.device_kind.lower()
        if "v7" in kind or "v4" in kind or "v5p" in kind:
            return 2
    except Exception:
        pass
    return 1


def _vpu_has_bf16():
    """v6e/v7x VPUs do bf16 natively; v2-v5 do not (upcast to f32 there)."""
    try:
        kind = jax.devices()[0].device_kind.lower()
        return not any(t in kind for t in ("v2", "v3", "v4", "v5"))
    except Exception:
        return False


def _scale_dtype(x_dtype):
    if x_dtype == jnp.bfloat16 and _vpu_has_bf16():
        return jnp.bfloat16
    return jnp.float32


def _budgets(max_block_bytes=None):
    """(per-x-block byte budget, vmem_limit_bytes) derived from the chip.
    The fused kernel keeps 4 x-sized blocks live (in + out, double-buffered),
    so the block budget is ~1/8 of the scoped limit for headroom.
    128 MiB chips (v5e/v6e) -> ~96 MiB limit / ~12 MiB blocks;
    64 MiB chips (v7x)      -> ~48 MiB limit / ~6 MiB blocks."""
    vmem_cap = _vmem_capacity_bytes()
    vmem_limit = max(32 * _MiB, min((vmem_cap * 3) // 4, 96 * _MiB))
    block_budget = min(16 * _MiB, vmem_limit // 8)
    if max_block_bytes is not None:
        block_budget = min(block_budget, int(max_block_bytes))
    return block_budget, vmem_limit


def _divisor_at_most(n, cap):
    cap = max(1, min(n, int(cap)))
    while n % cap:
        cap -= 1
    return cap


def _batch_tile(N, per_batch_bytes, budget_bytes, num_cores):
    """Batches per fused block: as big as the budget allows; only force extra
    grid steps (>= 2 per core) on chips that actually have >1 TensorCore so
    single-core v5e/v6e keep the largest possible block."""
    tb = _divisor_at_most(N, max(1, budget_bytes // max(per_batch_bytes, 1)))
    if num_cores >= 2:
        min_steps = min(N, 2 * num_cores)
        while N // tb < min_steps and tb > 1:
            tb = _divisor_at_most(N, tb - 1)
    return tb


def _spatial_tile(HW, C, itemsize, budget_bytes):
    """Largest multiple-of-128 divisor of HW whose (1, C, thw) block fits the
    budget; full HW when HW is not 128-divisible (full-dim blocks are always
    legal).  The budget is a soft target: at least one 128-lane tile is used."""
    if HW % 128 != 0:
        return HW
    best = 128
    t = 128
    while t <= HW:
        if HW % t == 0 and C * t * itemsize <= budget_bytes:
            best = t
        t += 128
    return best


def _prep_params(w1, b1, w2, b2):
    C, mid = w1.shape
    return (w1.astype(jnp.float32),
            b1.reshape(1, mid).astype(jnp.float32),
            w2.astype(jnp.float32),
            b2.reshape(1, C).astype(jnp.float32))


# ---------------------------------------------------------------------------
# fused single-pass kernel: pool + gate MLP + scale with a resident x block
# ---------------------------------------------------------------------------
def _se_fused(x3, w1, b1_2d, w2, b2_2d, *, tb, channels_last, mul_dtype,
              vmem_limit):
    N, d1, d2 = x3.shape          # (N, C, HW) or (N, HW, C)
    C, mid = w1.shape
    HW = d1 if channels_last else d2
    inv_hw = 1.0 / HW
    pool_axis = 1 if channels_last else 2

    def kernel(x_ref, w1_ref, b1_ref, w2_ref, b2_ref, o_ref):
        x = x_ref[...]
        # f32 pooling accumulation (bf16-safe); the tiny MLP stays f32.
        pooled = jnp.sum(x.astype(jnp.float32), axis=pool_axis) * inv_hw   # (tb, C)
        h = jnp.dot(pooled, w1_ref[...],
                    preferred_element_type=jnp.float32) + b1_ref[...]
        h = h * jax.nn.sigmoid(h)                                          # SiLU
        s = jnp.dot(h, w2_ref[...],
                    preferred_element_type=jnp.float32) + b2_ref[...]
        gate = jax.nn.sigmoid(s).astype(mul_dtype)                         # (tb, C)
        g = gate[:, None, :] if channels_last else gate[:, :, None]
        o_ref[...] = (x.astype(mul_dtype) * g).astype(o_ref.dtype)

    return pl.pallas_call(
        kernel,
        out_shape=jax.ShapeDtypeStruct(x3.shape, x3.dtype),
        grid_spec=pltpu.PrefetchScalarGridSpec(
            num_scalar_prefetch=0,
            grid=(N // tb,),
            in_specs=[
                pl.BlockSpec((tb, d1, d2), lambda b: (b, 0, 0)),
                # Tiny constant weight/bias blocks (same block every step, so
                # the pipeline does not re-fetch them; their VMEM cost is <1 KiB).
                pl.BlockSpec((C, mid), lambda b: (0, 0)),
                pl.BlockSpec((1, mid), lambda b: (0, 0)),
                pl.BlockSpec((mid, C), lambda b: (0, 0)),
                pl.BlockSpec((1, C), lambda b: (0, 0)),
            ],
            out_specs=pl.BlockSpec((tb, d1, d2), lambda b: (b, 0, 0)),
        ),
        compiler_params=pltpu.CompilerParams(
            dimension_semantics=("parallel",),
            vmem_limit_bytes=vmem_limit,
        ),
    )(x3, w1, b1_2d, w2, b2_2d)


# ---------------------------------------------------------------------------
# two-pass streaming fallback (per-batch block too large for VMEM), NCHW
# ---------------------------------------------------------------------------
def _se_two_pass(x3, w1, b1_2d, w2, b2_2d, *, mul_dtype, block_budget,
                 vmem_limit):
    N, C, HW = x3.shape
    mid = w1.shape[1]
    thw = _spatial_tile(HW, C, x3.dtype.itemsize, block_budget)
    grid = (N, HW // thw)
    inv_hw = 1.0 / HW

    # -------- pass 1: pool + gate --------
    def pool_gate_kernel(x_ref, w1_ref, b1_ref, w2_ref, b2_ref, gate_ref, acc_ref):
        hw_i = pl.program_id(1)

        @pl.when(hw_i == 0)
        def _():
            acc_ref[...] = jnp.zeros_like(acc_ref)

        # f32 accumulation of spatial partial sums (pass is HBM-bound, so the
        # per-step lane reduce is hidden behind the DMA).
        acc_ref[...] += jnp.sum(x_ref[...].astype(jnp.float32), axis=-1)

        @pl.when(hw_i == pl.num_programs(1) - 1)
        def _():
            pooled = acc_ref[...] * inv_hw                                 # (1, C)
            h = jnp.dot(pooled, w1_ref[...],
                        preferred_element_type=jnp.float32) + b1_ref[...]
            h = h * jax.nn.sigmoid(h)                                      # SiLU
            s = jnp.dot(h, w2_ref[...],
                        preferred_element_type=jnp.float32) + b2_ref[...]
            # Gate emitted as (N, 1, C): the block's trailing dims are full
            # dims -> always a legal, unmasked store regardless of N / C.
            gate_ref[...] = jax.nn.sigmoid(s)[:, None, :]

    gate = pl.pallas_call(
        pool_gate_kernel,
        out_shape=jax.ShapeDtypeStruct((N, 1, C), jnp.float32),
        grid_spec=pltpu.PrefetchScalarGridSpec(
            num_scalar_prefetch=0,
            grid=grid,
            in_specs=[
                pl.BlockSpec((1, C, thw), lambda b, h: (b, 0, h)),
                pl.BlockSpec((C, mid), lambda b, h: (0, 0)),
                pl.BlockSpec((1, mid), lambda b, h: (0, 0)),
                pl.BlockSpec((mid, C), lambda b, h: (0, 0)),
                pl.BlockSpec((1, C), lambda b, h: (0, 0)),
            ],
            out_specs=pl.BlockSpec((1, 1, C), lambda b, h: (b, 0, 0)),
            scratch_shapes=[pltpu.VMEM((1, C), jnp.float32)],
        ),
        compiler_params=pltpu.CompilerParams(
            dimension_semantics=("parallel", "arbitrary"),
            vmem_limit_bytes=vmem_limit,
        ),
    )(x3, w1, b1_2d, w2, b2_2d)

    # (N, C, 1): channels ride the sublane axis -> cheap lane broadcast below.
    gate3 = gate.reshape(N, C, 1)

    # -------- pass 2: streaming elementwise scale --------
    def scale_kernel(x_ref, g_ref, o_ref):
        x = x_ref[...].astype(mul_dtype)
        g = g_ref[...].astype(mul_dtype)
        o_ref[...] = (x * g).astype(o_ref.dtype)

    return pl.pallas_call(
        scale_kernel,
        out_shape=jax.ShapeDtypeStruct((N, C, HW), x3.dtype),
        grid_spec=pltpu.PrefetchScalarGridSpec(
            num_scalar_prefetch=0,
            grid=grid,
            in_specs=[
                pl.BlockSpec((1, C, thw), lambda b, h: (b, 0, h)),
                pl.BlockSpec((1, C, 1), lambda b, h: (b, 0, 0)),
            ],
            out_specs=pl.BlockSpec((1, C, thw), lambda b, h: (b, 0, h)),
        ),
        compiler_params=pltpu.CompilerParams(
            dimension_semantics=("parallel", "parallel"),
            vmem_limit_bytes=vmem_limit,
        ),
    )(x3, gate3)


# ---------------------------------------------------------------------------
# public entry points
# ---------------------------------------------------------------------------
def se_block(x_nchw, w1, b1, w2, b2, *, max_block_bytes=None):
    """SEBlock forward for NCHW activations (the nn.Module contract).

    x_nchw: (N, C, H, W)
    w1: (C, mid)  = Conv2d(C, mid, 1).weight[:, :, 0, 0].T ; b1: (mid,)
    w2: (mid, C)  = Conv2d(mid, C, 1).weight[:, :, 0, 0].T ; b2: (C,)
    """
    N, C, H, W = x_nchw.shape
    HW = H * W
    x3 = x_nchw.reshape(N, C, HW)
    w1f, b1f, w2f, b2f = _prep_params(w1, b1, w2, b2)
    mul_dtype = _scale_dtype(x_nchw.dtype)

    block_budget, vmem_limit = _budgets(max_block_bytes)
    per_batch = C * HW * x_nchw.dtype.itemsize

    if per_batch <= block_budget:
        tb = _batch_tile(N, per_batch, block_budget, _num_tensorcores())
        out = _se_fused(x3, w1f, b1f, w2f, b2f, tb=tb, channels_last=False,
                        mul_dtype=mul_dtype, vmem_limit=vmem_limit)
    else:
        out = _se_two_pass(x3, w1f, b1f, w2f, b2f, mul_dtype=mul_dtype,
                           block_budget=block_budget, vmem_limit=vmem_limit)
    return out.reshape(N, C, H, W)


def se_block_channels_last(x_nhwc, w1, b1, w2, b2, *, max_block_bytes=None):
    """SEBlock forward for NHWC activations.  With C on the lane axis the
    loads/stores stay lane-dense even for 7x7 / 14x14 feature maps; use this
    entry point when the surrounding model already keeps activations NHWC."""
    N, H, W, C = x_nhwc.shape
    HW = H * W
    x3 = x_nhwc.reshape(N, HW, C)
    w1f, b1f, w2f, b2f = _prep_params(w1, b1, w2, b2)
    mul_dtype = _scale_dtype(x_nhwc.dtype)

    block_budget, vmem_limit = _budgets(max_block_bytes)
    per_batch = C * HW * x_nhwc.dtype.itemsize

    if per_batch <= block_budget:
        tb = _batch_tile(N, per_batch, block_budget, _num_tensorcores())
        out = _se_fused(x3, w1f, b1f, w2f, b2f, tb=tb, channels_last=True,
                        mul_dtype=mul_dtype, vmem_limit=vmem_limit)
        return out.reshape(N, H, W, C)

    # Oversized per-batch blocks: fall back through the NCHW streaming path
    # (a native channels-last two-pass fallback is a possible follow-up).
    out = se_block(jnp.transpose(x_nhwc, (0, 3, 1, 2)), w1, b1, w2, b2,
                   max_block_bytes=max_block_bytes)
    return jnp.transpose(out, (0, 2, 3, 1))


# ---------------------------------------------------------------------------
# self-test
# ---------------------------------------------------------------------------
if __name__ == "__main__":
    key = jax.random.PRNGKey(0)
    kx, k1, k2, k3, k4, kx2 = jax.random.split(key, 6)

    def reference(x_nchw, w1, b1, w2, b2):
        pooled = jnp.mean(x_nchw, axis=(2, 3))                  # (N, C)
        h = pooled @ w1 + b1
        h = h * jax.nn.sigmoid(h)                               # SiLU
        gate = jax.nn.sigmoid(h @ w2 + b2)                      # (N, C)
        return x_nchw * gate[:, :, None, None]

    # --- case 1: SEBlock(n_in=48, r=24), 16x16 map -> fused single pass ------
    N, C, H, W = 4, 48, 16, 16
    mid = C // 24
    x = jax.random.normal(kx, (N, C, H, W), dtype=jnp.float32)
    w1 = jax.random.normal(k1, (C, mid), dtype=jnp.float32) * 0.1
    b1 = jax.random.normal(k2, (mid,), dtype=jnp.float32) * 0.1
    w2 = jax.random.normal(k3, (mid, C), dtype=jnp.float32) * 0.1
    b2 = jax.random.normal(k4, (C,), dtype=jnp.float32) * 0.1

    out = se_block(x, w1, b1, w2, b2)
    jax.block_until_ready(out)
    ref = reference(x, w1, b1, w2, b2)
    assert jnp.allclose(out, ref, atol=1e-5, rtol=1e-5), "fused NCHW mismatch"

    # --- case 2: same problem, artificially tiny budget -> two-pass fallback -
    out2 = se_block(x, w1, b1, w2, b2, max_block_bytes=8 * 1024)
    jax.block_until_ready(out2)
    assert jnp.allclose(out2, ref, atol=1e-5, rtol=1e-5), "two-pass mismatch"

    # --- case 3: channels-last entry point on a 7x7 map ----------------------
    N2, C2, H2, W2, mid2 = 2, 64, 7, 7, 4
    xc = jax.random.normal(kx2, (N2, C2, H2, W2), dtype=jnp.float32)
    w1c = jax.random.normal(k1, (C2, mid2), dtype=jnp.float32) * 0.1
    b1c = jax.random.normal(k2, (mid2,), dtype=jnp.float32) * 0.1
    w2c = jax.random.normal(k3, (mid2, C2), dtype=jnp.float32) * 0.1
    b2c = jax.random.normal(k4, (C2,), dtype=jnp.float32) * 0.1

    out3 = se_block_channels_last(jnp.transpose(xc, (0, 2, 3, 1)),
                                  w1c, b1c, w2c, b2c)
    jax.block_until_ready(out3)
    ref3 = reference(xc, w1c, b1c, w2c, b2c)
    assert jnp.allclose(jnp.transpose(out3, (0, 3, 1, 2)), ref3,
                        atol=1e-5, rtol=1e-5), "channels-last mismatch"

    print("KERNEL_OK")
</pallas_src>

<mosaic_0001>
module attributes {stable_mosaic.version = 11 : i64} {
  func.func @kernel(%arg0: i32, %arg1: memref<4x48x256xf32, #tpu.memory_space<vmem>>, %arg2: memref<48x2xf32, #tpu.memory_space<vmem>>, %arg3: memref<1x2xf32, #tpu.memory_space<vmem>>, %arg4: memref<2x48xf32, #tpu.memory_space<vmem>>, %arg5: memref<1x48xf32, #tpu.memory_space<vmem>>, %arg6: memref<4x48x256xf32, #tpu.memory_space<vmem>>) attributes {dimension_semantics = [#tpu.dimension_semantics<parallel>], iteration_bounds = array<i64: 1>, scalar_prefetch = 0 : i64, scratch_operands = 0 : i64, tpu.core_type = #tpu.core_type<tc>, window_params = [{transform_indices = @transform_0, window_bounds = array<i64: 4, 48, 256>}, {pipeline_mode = #tpu.pipeline_mode<synchronous>, transform_indices = @transform_1, window_bounds = array<i64: 48, 2>}, {pipeline_mode = #tpu.pipeline_mode<synchronous>, transform_indices = @transform_2, window_bounds = array<i64: 1, 2>}, {pipeline_mode = #tpu.pipeline_mode<synchronous>, transform_indices = @transform_3, window_bounds = array<i64: 2, 48>}, {pipeline_mode = #tpu.pipeline_mode<synchronous>, transform_indices = @transform_4, window_bounds = array<i64: 1, 48>}, {transform_indices = @transform_5, window_bounds = array<i64: 4, 48, 256>}]} {
    %c0 = arith.constant 0 : index
    %c0_0 = arith.constant 0 : index
    %c0_1 = arith.constant 0 : index
    %0 = vector.load %arg1[%c0, %c0_0, %c0_1] : memref<4x48x256xf32, #tpu.memory_space<vmem>>, vector<4x48x256xf32>
    %cst = arith.constant dense<0.000000e+00> : vector<4x48xf32>
    %1 = vector.multi_reduction <add>, %0, %cst [2] : vector<4x48x256xf32> to vector<4x48xf32>
    %cst_2 = arith.constant 3.906250e-03 : f32
    %2 = vector.broadcast %cst_2 : f32 to vector<4x48xf32>
    %3 = arith.mulf %1, %2 : vector<4x48xf32>
    %c0_3 = arith.constant 0 : index
    %c0_4 = arith.constant 0 : index
    %4 = vector.load %arg2[%c0_3, %c0_4] : memref<48x2xf32, #tpu.memory_space<vmem>>, vector<48x2xf32>
    %cst_5 = arith.constant dense<0.000000e+00> : vector<4x2xf32>
    %5 = tpu.matmul %3, %4, %cst_5 {dimension_numbers = #tpu.dot_dimension_numbers<[1], [0], [0], [1], [0, 0, 1, 1], [], []>} : vector<4x48xf32>, vector<48x2xf32>, vector<4x2xf32> -> vector<4x2xf32>
    %c0_6 = arith.constant 0 : index
    %c0_7 = arith.constant 0 : index
    %6 = vector.load %arg3[%c0_6, %c0_7] : memref<1x2xf32, #tpu.memory_space<vmem>>, vector<1x2xf32>
    %7 = vector.broadcast %6 : vector<1x2xf32> to vector<4x2xf32>
    %8 = arith.addf %5, %7 : vector<4x2xf32>
    %9 = arith.negf %8 : vector<4x2xf32>
    %10 = math.exp %9 : vector<4x2xf32>
    %cst_8 = arith.constant 1.000000e+00 : f32
    %11 = vector.broadcast %cst_8 : f32 to vector<4x2xf32>
    %12 = arith.addf %11, %10 : vector<4x2xf32>
    %13 = arith.divf %11, %12 : vector<4x2xf32>
    %14 = arith.mulf %8, %13 : vector<4x2xf32>
    %c0_9 = arith.constant 0 : index
    %c0_10 = arith.constant 0 : index
    %15 = vector.load %arg4[%c0_9, %c0_10] : memref<2x48xf32, #tpu.memory_space<vmem>>, vector<2x48xf32>
    %cst_11 = arith.constant dense<0.000000e+00> : vector<4x48xf32>
    %16 = tpu.matmul %14, %15, %cst_11 {dimension_numbers = #tpu.dot_dimension_numbers<[1], [0], [0], [1], [0, 0, 1, 1], [], []>} : vector<4x2xf32>, vector<2x48xf32>, vector<4x48xf32> -> vector<4x48xf32>
    %c0_12 = arith.constant 0 : index
    %c0_13 = arith.constant 0 : index
    %17 = vector.load %arg5[%c0_12, %c0_13] : memref<1x48xf32, #tpu.memory_space<vmem>>, vector<1x48xf32>
    %18 = vector.broadcast %17 : vector<1x48xf32> to vector<4x48xf32>
    %19 = arith.addf %16, %18 : vector<4x48xf32>
    %20 = arith.negf %19 : vector<4x48xf32>
    %21 = math.exp %20 : vector<4x48xf32>
    %cst_14 = arith.constant 1.000000e+00 : f32
    %22 = vector.broadcast %cst_14 : f32 to vector<4x48xf32>
    %23 = arith.addf %22, %21 : vector<4x48xf32>
    %24 = arith.divf %22, %23 : vector<4x48xf32>
    %25 = vector.shape_cast %24 : vector<4x48xf32> to vector<4x48x1xf32>
    %26 = vector.broadcast %25 : vector<4x48x1xf32> to vector<4x48x256xf32>
    %27 = arith.mulf %0, %26 : vector<4x48x256xf32>
    %c0_15 = arith.constant 0 : index
    %c0_16 = arith.constant 0 : index
    %c0_17 = arith.constant 0 : index
    %28 = vector.load %arg6[%c0_15, %c0_16, %c0_17] : memref<4x48x256xf32, #tpu.memory_space<vmem>>, vector<4x48x256xf32>
    tpu.vector_store %arg6[%c0_15, %c0_16, %c0_17], %27 {strides = array<i32>} : memref<4x48x256xf32, #tpu.memory_space<vmem>>, vector<4x48x256xf32>,
    return
  }
  func.func @transform_0(%arg0: i32) -> (i32, i32, i32) {
    %c0_i32 = arith.constant 0 : i32
    %c0_i32_0 = arith.constant 0 : i32
    %c0_i32_1 = arith.constant 0 : i32
    return %arg0, %c0_i32, %c0_i32_0 : i32, i32, i32
  }
  func.func @transform_1(%arg0: i32) -> (i32, i32) {
    %c0_i32 = arith.constant 0 : i32
    %c0_i32_0 = arith.constant 0 : i32
    %c0_i32_1 = arith.constant 0 : i32
    return %c0_i32, %c0_i32_0 : i32, i32
  }
  func.func @transform_2(%arg0: i32) -> (i32, i32) {
    %c0_i32 = arith.constant 0 : i32
    %c0_i32_0 = arith.constant 0 : i32
    %c0_i32_1 = arith.constant 0 : i32
    return %c0_i32, %c0_i32_0 : i32, i32
  }
  func.func @transform_3(%arg0: i32) -> (i32, i32) {
    %c0_i32 = arith.constant 0 : i32
    %c0_i32_0 = arith.constant 0 : i32
    %c0_i32_1 = arith.constant 0 : i32
    return %c0_i32, %c0_i32_0 : i32, i32
  }
  func.func @transform_4(%arg0: i32) -> (i32, i32) {
    %c0_i32 = arith.constant 0 : i32
    %c0_i32_0 = arith.constant 0 : i32
    %c0_i32_1 = arith.constant 0 : i32
    return %c0_i32, %c0_i32_0 : i32, i32
  }
  func.func @transform_5(%arg0: i32) -> (i32, i32, i32) {
    %c0_i32 = arith.constant 0 : i32
    %c0_i32_0 = arith.constant 0 : i32
    %c0_i32_1 = arith.constant 0 : i32
    return %arg0, %c0_i32, %c0_i32_0 : i32, i32, i32
  }
}

</mosaic_0001>

<llo_original>
// kernel: tpu_custom_call.1
$region0: #{tpu_custom_call.1}
  #allocation0 [shape = 'u32[]', space=smem, size = 0x4, offset = 0x4, fixed_abs, tag = 'smem constant byte address 0x4 - core index']
  #allocation1 [shape = 'u32[144,128]{1,0:T(1,128)}', space=vmem, size = 0x12000, scoped, tag = 'internal scratch']
  %s0 = inlined_call_operand.hbm [shape: f32[4,48,256], index: 0, kind: input, shape index: {}]
  %s1 = inlined_call_operand.vmem [shape: f32[48,2], index: 1, kind: input, shape index: {}]
  %s2 = inlined_call_operand.vmem [shape: f32[1,2], index: 2, kind: input, shape index: {}]
  %s3 = inlined_call_operand.vmem [shape: f32[2,48], index: 3, kind: input, shape index: {}]
  %s4 = inlined_call_operand.vmem [shape: f32[1,48], index: 4, kind: input, shape index: {}]
  %s5 = inlined_call_operand.hbm [shape: f32[4,48,256], index: 5, kind: output, shape index: {}]
  %s6 = sld [smem:[#allocation0]]
  $region34: #{tpu_custom_call.1} parent=0
    _
  %s8 = ssub.s32 1, %s6
  %s9 = scalar_select 0, %s8, %s6
  $region1: #{tpu_custom_call.1} parent=0
    #allocation2 [shape = 'u8[196608]{0}', space=vmem, size = 0x30000, scoped, tag = 'input window, operand 0, single buffered']
    #allocation3 [shape = 's32[1]{0}', space=sflag, size = 0x4, scoped, tag = 'scoped memory for tpu_custom_call.1']
    #allocation4 [shape = 's32[1]{0}', space=sflag, size = 0x4, scoped, tag = 'scoped memory for tpu_custom_call.1']
    #allocation5 [shape = 'u8[196608]{0}', space=vmem, size = 0x30000, scoped, tag = 'output window, operand 0, single buffered']
    %10 = vsyncpa [#allocation3], 0
    %11 = vsyncpa [#allocation4], 0
    // Predicated region
    $region2: #{tpu_custom_call.1} parent=1 // pred_check
      _
    $region3: #{tpu_custom_call.1} parent=1 // pred_check_branch
      %13 = sbr.rel (0) target = $region5
    $region4: #{tpu_custom_call.1} parent=1 // pred_region
      %s15 = ssub.s32 6144, 6144
      %16 = vsyncadd [#allocation3], %s15
      %s17 = sshll.u32 [#allocation2], 4
      %s18 = int_to_ptr.vmem [resolvable:$true] %s17
      %23 = dma.hbm_to_vmem [thread:$0]  %s0, 6144, %s18, [#allocation3], 256, 256, 16
    $region5: #{tpu_custom_call.1} parent=1 // pred_fallthru
      _
    // Predicated region
    $region6: #{tpu_custom_call.1} parent=1 // pred_check
      _
    $region7: #{tpu_custom_call.1} parent=1 // pred_check_branch
      %25 = sbr.rel (0) target = $region9
    $region8: #{tpu_custom_call.1} parent=1 // pred_region
      _
    $region9: #{tpu_custom_call.1} parent=1 // pred_fallthru
      _
    // Predicated region
    $region10: #{tpu_custom_call.1} parent=1 // pred_check
      _
    $region11: #{tpu_custom_call.1} parent=1 // pred_check_branch
      %27 = sbr.rel (0) target = $region13
    $region12: #{tpu_custom_call.1} parent=1 // pred_region
      _
    $region13: #{tpu_custom_call.1} parent=1 // pred_fallthru
      _
    // Predicated region
    $region14: #{tpu_custom_call.1} parent=1 // pred_check
      _
    $region15: #{tpu_custom_call.1} parent=1 // pred_check_branch
      %29 = sbr.rel (0) target = $region17
    $region16: #{tpu_custom_call.1} parent=1 // pred_region
      _
    $region17: #{tpu_custom_call.1} parent=1 // pred_fallthru
      _
    // Predicated region
    $region18: #{tpu_custom_call.1} parent=1 // pred_check
      _
    $region19: #{tpu_custom_call.1} parent=1 // pred_check_branch
      %31 = sbr.rel (0) target = $region21
    $region20: #{tpu_custom_call.1} parent=1 // pred_region
      _
    $region21: #{tpu_custom_call.1} parent=1 // pred_fallthru
      _
    // Predicated region
    $region22: #{tpu_custom_call.1} parent=1 // pred_check
      _
    $region23: #{tpu_custom_call.1} parent=1 // pred_check_branch
      %33 = sbr.rel (0) target = $region25
    $region24: #{tpu_custom_call.1} parent=1 // pred_region
      %34 = dma.done [#allocation3], 6144
    $region25: #{tpu_custom_call.1} parent=1 // pred_fallthru
      _
    %v35 = vld [vmem:[#allocation2] sm:$0xff]
    %v36 = vld [vmem:[#allocation2 + $0x8] sm:$0xff]
    %v37 = vld [vmem:[#allocation2 + $0x10] sm:$0xff]
    %v38 = vld [vmem:[#allocation2 + $0x18] sm:$0xff]
    %v39 = vld [vmem:[#allocation2 + $0x20] sm:$0xff]
    %v40 = vld [vmem:[#allocation2 + $0x28] sm:$0xff]
    %v41 = vld [vmem:[#allocation2 + $0x30] sm:$0xff]
    %v42 = vld [vmem:[#allocation2 + $0x38] sm:$0xff]
    %v43 = vld [vmem:[#allocation2 + $0x40] sm:$0xff]
    %v44 = vld [vmem:[#allocation2 + $0x48] sm:$0xff]
    %v45 = vld [vmem:[#allocation2 + $0x50] sm:$0xff]
    %v46 = vld [vmem:[#allocation2 + $0x58] sm:$0xff]
    %v47 = vld [vmem:[#allocation2 + $0x60] sm:$0xff]
    %v48 = vld [vmem:[#allocation2 + $0x68] sm:$0xff]
    %v49 = vld [vmem:[#allocation2 + $0x70] sm:$0xff]
    %v50 = vld [vmem:[#allocation2 + $0x78] sm:$0xff]
    %v51 = vld [vmem:[#allocation2 + $0x80] sm:$0xff]
    %v52 = vld [vmem:[#allocation2 + $0x88] sm:$0xff]
    %v53 = vld [vmem:[#allocation2 + $0x90] sm:$0xff]
    %v54 = vld [vmem:[#allocation2 + $0x98] sm:$0xff]
    %v55 = vld [vmem:[#allocation2 + $0xa0] sm:$0xff]
    %v56 = vld [vmem:[#allocation2 + $0xa8] sm:$0xff]
    %v57 = vld [vmem:[#allocation2 + $0xb0] sm:$0xff]
    %v58 = vld [vmem:[#allocation2 + $0xb8] sm:$0xff]
    %v59 = vld [vmem:[#allocation2 + $0xc0] sm:$0xff]
    %v60 = vld [vmem:[#allocation2 + $0xc8] sm:$0xff]
    %v61 = vld [vmem:[#allocation2 + $0xd0] sm:$0xff]
    %v62 = vld [vmem:[#allocation2 + $0xd8] sm:$0xff]
    %v63 = vld [vmem:[#allocation2 + $0xe0] sm:$0xff]
    %v64 = vld [vmem:[#allocation2 + $0xe8] sm:$0xff]
    %v65 = vld [vmem:[#allocation2 + $0xf0] sm:$0xff]
    %v66 = vld [vmem:[#allocation2 + $0xf8] sm:$0xff]
    %v67 = vld [vmem:[#allocation2 + $0x100] sm:$0xff]
    %v68 = vld [vmem:[#allocation2 + $0x108] sm:$0xff]
    %v69 = vld [vmem:[#allocation2 + $0x110] sm:$0xff]
    %v70 = vld [vmem:[#allocation2 + $0x118] sm:$0xff]
    %v71 = vld [vmem:[#allocation2 + $0x120] sm:$0xff]
    %v72 = vld [vmem:[#allocation2 + $0x128] sm:$0xff]
    %v73 = vld [vmem:[#allocation2 + $0x130] sm:$0xff]
    %v74 = vld [vmem:[#allocation2 + $0x138] sm:$0xff]
    %v75 = vld [vmem:[#allocation2 + $0x140] sm:$0xff]
    %v76 = vld [vmem:[#allocation2 + $0x148] sm:$0xff]
    %v77 = vld [vmem:[#allocation2 + $0x150] sm:$0xff]
    %v78 = vld [vmem:[#allocation2 + $0x158] sm:$0xff]
    %v79 = vld [vmem:[#allocation2 + $0x160] sm:$0xff]
    %v80 = vld [vmem:[#allocation2 + $0x168] sm:$0xff]
    %v81 = vld [vmem:[#allocation2 + $0x170] sm:$0xff]
    %v82 = vld [vmem:[#allocation2 + $0x178] sm:$0xff]
    %v83 = vadd.f32 %v35, %v36
    %84 = vadd.xlane.f32.xlu0 %v83
    %v85 = vpop.xlane.xlu0 %84
    %v86 = vadd.f32 %v37, %v38
    %87 = vadd.xlane.f32.xlu0 %v86
    %v88 = vpop.xlane.xlu0 %87
    %v89 = vadd.f32 %v39, %v40
    %90 = vadd.xlane.f32.xlu0 %v89
    %v91 = vpop.xlane.xlu0 %90
    %v92 = vadd.f32 %v41, %v42
    %93 = vadd.xlane.f32.xlu0 %v92
    %v94 = vpop.xlane.xlu0 %93
    %v95 = vadd.f32 %v43, %v44
    %96 = vadd.xlane.f32.xlu0 %v95
    %v97 = vpop.xlane.xlu0 %96
    %v98 = vadd.f32 %v45, %v46
    %99 = vadd.xlane.f32.xlu0 %v98
    %v100 = vpop.xlane.xlu0 %99
    %v101 = vadd.f32 %v47, %v48
    %102 = vadd.xlane.f32.xlu0 %v101
    %v103 = vpop.xlane.xlu0 %102
    %v104 = vadd.f32 %v49, %v50
    %105 = vadd.xlane.f32.xlu0 %v104
    %v106 = vpop.xlane.xlu0 %105
    %v107 = vadd.f32 %v51, %v52
    %108 = vadd.xlane.f32.xlu0 %v107
    %v109 = vpop.xlane.xlu0 %108
    %v110 = vadd.f32 %v53, %v54
    %111 = vadd.xlane.f32.xlu0 %v110
    %v112 = vpop.xlane.xlu0 %111
    %v113 = vadd.f32 %v55, %v56
    %114 = vadd.xlane.f32.xlu0 %v113
    %v115 = vpop.xlane.xlu0 %114
    %v116 = vadd.f32 %v57, %v58
    %117 = vadd.xlane.f32.xlu0 %v116
    %v118 = vpop.xlane.xlu0 %117
    %v119 = vadd.f32 %v59, %v60
    %120 = vadd.xlane.f32.xlu0 %v119
    %v121 = vpop.xlane.xlu0 %120
    %v122 = vadd.f32 %v61, %v62
    %123 = vadd.xlane.f32.xlu0 %v122
    %v124 = vpop.xlane.xlu0 %123
    %v125 = vadd.f32 %v63, %v64
    %126 = vadd.xlane.f32.xlu0 %v125
    %v127 = vpop.xlane.xlu0 %126
    %v128 = vadd.f32 %v65, %v66
    %129 = vadd.xlane.f32.xlu0 %v128
    %v130 = vpop.xlane.xlu0 %129
    %v131 = vadd.f32 %v67, %v68
    %132 = vadd.xlane.f32.xlu0 %v131
    %v133 = vpop.xlane.xlu0 %132
    %v134 = vadd.f32 %v69, %v70
    %135 = vadd.xlane.f32.xlu0 %v134
    %v136 = vpop.xlane.xlu0 %135
    %v137 = vadd.f32 %v71, %v72
    %138 = vadd.xlane.f32.xlu0 %v137
    %v139 = vpop.xlane.xlu0 %138
    %v140 = vadd.f32 %v73, %v74
    %141 = vadd.xlane.f32.xlu0 %v140
    %v142 = vpop.xlane.xlu0 %141
    %v143 = vadd.f32 %v75, %v76
    %144 = vadd.xlane.f32.xlu0 %v143
    %v145 = vpop.xlane.xlu0 %144
    %v146 = vadd.f32 %v77, %v78
    %147 = vadd.xlane.f32.xlu0 %v146
    %v148 = vpop.xlane.xlu0 %147
    %v149 = vadd.f32 %v79, %v80
    %150 = vadd.xlane.f32.xlu0 %v149
    %v151 = vpop.xlane.xlu0 %150
    %v152 = vadd.f32 %v81, %v82
    %153 = vadd.xlane.f32.xlu0 %v152
    %v154 = vpop.xlane.xlu0 %153
    %v155 = vmul.f32 %v85, 0.00390625
    %v156 = vmul.f32 %v88, 0.00390625
    %v157 = vmul.f32 %v91, 0.00390625
    %v158 = vmul.f32 %v94, 0.00390625
    %v159 = vmul.f32 %v97, 0.00390625
    %v160 = vmul.f32 %v100, 0.00390625
    %v161 = vmul.f32 %v103, 0.00390625
    %v162 = vmul.f32 %v106, 0.00390625
    %v163 = vmul.f32 %v109, 0.00390625
    %v164 = vmul.f32 %v112, 0.00390625
    %v165 = vmul.f32 %v115, 0.00390625
    %v166 = vmul.f32 %v118, 0.00390625
    %v167 = vmul.f32 %v121, 0.00390625
    %v168 = vmul.f32 %v124, 0.00390625
    %v169 = vmul.f32 %v127, 0.00390625
    %v170 = vmul.f32 %v130, 0.00390625
    %v171 = vmul.f32 %v133, 0.00390625
    %v172 = vmul.f32 %v136, 0.00390625
    %v173 = vmul.f32 %v139, 0.00390625
    %v174 = vmul.f32 %v142, 0.00390625
    %v175 = vmul.f32 %v145, 0.00390625
    %v176 = vmul.f32 %v148, 0.00390625
    %v177 = vmul.f32 %v151, 0.00390625
    %v178 = vmul.f32 %v154, 0.00390625
    %v179 = vld [vmem:[%s1] sm:$0xff]
    %v180 = vld [vmem:[%s1 + $0x8] sm:$0xff]
    %v181 = vld [vmem:[%s1 + $0x10] sm:$0xff]
    %v182 = vld [vmem:[%s1 + $0x18] sm:$0xff]
    %v183 = vld [vmem:[%s1 + $0x20] sm:$0xff]
    %v184 = vld [vmem:[%s1 + $0x28] sm:$0xff]
    %v185 = vld [vmem:[%s2] sm:$0x1]
    %v187 = vlaneseq
    %v188 = vshrl.u32 %v187, 7
    %v189 = vsub.s32 0, %v188
    %v190 = vrot.slane %v185, %v189
    %v216 = vlaneseq
    %v217 = vand.u32 %v216, 127
    %v218 = vlaneseq
    %v219 = vshrl.u32 %v218, 7
    %v220 = vsub.s32 %v217, %v219
    %v221 = vrot.slane %v155, %v220
    %v222 = vadd.s32 %v217, 4294967288
    %v223 = vlaneseq
    %v224 = vshrl.u32 %v223, 7
    %v225 = vsub.s32 %v222, %v224
    %v226 = vrot.slane %v156, %v225
    %vm227 = vcmask 130112
    %v228 = vsel %vm227, %v226, %v221
    %v229 = vadd.s32 %v217, 4294967280
    %v230 = vlaneseq
    %v231 = vshrl.u32 %v230, 7
    %v232 = vsub.s32 %v229, %v231
    %v233 = vrot.slane %v157, %v232
    %vm234 = vcmask 195712
    %v235 = vsel %vm234, %v233, %v228
    %v236 = vadd.s32 %v217, 4294967272
    %v237 = vlaneseq
    %v238 = vshrl.u32 %v237, 7
    %v239 = vsub.s32 %v236, %v238
    %v240 = vrot.slane %v158, %v239
    %vm241 = vcmask 261312
    %v242 = vsel %vm241, %v240, %v235
    %v243 = vadd.s32 %v217, 4294967264
    %v244 = vlaneseq
    %v245 = vshrl.u32 %v244, 7
    %v246 = vsub.s32 %v243, %v245
    %v247 = vrot.slane %v159, %v246
    %vm248 = vcmask 326912
    %v249 = vsel %vm248, %v247, %v242
    %v250 = vadd.s32 %v217, 4294967256
    %v251 = vlaneseq
    %v252 = vshrl.u32 %v251, 7
    %v253 = vsub.s32 %v250, %v252
    %v254 = vrot.slane %v160, %v253
    %vm255 = vcmask 392512
    %v256 = vsel %vm255, %v254, %v249
    %v257 = vlaneseq
    %v258 = vshrl.u32 %v257, 7
    %v259 = vsub.s32 %v217, %v258
    %v260 = vrot.slane %v161, %v259
    %v261 = vlaneseq
    %v262 = vshrl.u32 %v261, 7
    %v263 = vsub.s32 %v222, %v262
    %v264 = vrot.slane %v162, %v263
    %v265 = vsel %vm227, %v264, %v260
    %v266 = vlaneseq
    %v267 = vshrl.u32 %v266, 7
    %v268 = vsub.s32 %v229, %v267
    %v269 = vrot.slane %v163, %v268
    %v270 = vsel %vm234, %v269, %v265
    %v271 = vlaneseq
    %v272 = vshrl.u32 %v271, 7
    %v273 = vsub.s32 %v236, %v272
    %v274 = vrot.slane %v164, %v273
    %v275 = vsel %vm241, %v274, %v270
    %v276 = vlaneseq
    %v277 = vshrl.u32 %v276, 7
    %v278 = vsub.s32 %v243, %v277
    %v279 = vrot.slane %v165, %v278
    %v280 = vsel %vm248, %v279, %v275
    %v281 = vlaneseq
    %v282 = vshrl.u32 %v281, 7
    %v283 = vsub.s32 %v250, %v282
    %v284 = vrot.slane %v166, %v283
    %v285 = vsel %vm255, %v284, %v280
    %v286 = vlaneseq
    %v287 = vshrl.u32 %v286, 7
    %v288 = vsub.s32 %v217, %v287
    %v289 = vrot.slane %v167, %v288
    %v290 = vlaneseq
    %v291 = vshrl.u32 %v290, 7
    %v292 = vsub.s32 %v222, %v291
    %v293 = vrot.slane %v168, %v292
    %v294 = vsel %vm227, %v293, %v289
    %v295 = vlaneseq
    %v296 = vshrl.u32 %v295, 7
    %v297 = vsub.s32 %v229, %v296
    %v298 = vrot.slane %v169, %v297
    %v299 = vsel %vm234, %v298, %v294
    %v300 = vlaneseq
    %v301 = vshrl.u32 %v300, 7
    %v302 = vsub.s32 %v236, %v301
    %v303 = vrot.slane %v170, %v302
    %v304 = vsel %vm241, %v303, %v299
    %v305 = vlaneseq
    %v306 = vshrl.u32 %v305, 7
    %v307 = vsub.s32 %v243, %v306
    %v308 = vrot.slane %v171, %v307
    %v309 = vsel %vm248, %v308, %v304
    %v310 = vlaneseq
    %v311 = vshrl.u32 %v310, 7
    %v312 = vsub.s32 %v250, %v311
    %v313 = vrot.slane %v172, %v312
    %v314 = vsel %vm255, %v313, %v309
    %v315 = vlaneseq
    %v316 = vshrl.u32 %v315, 7
    %v317 = vsub.s32 %v217, %v316
    %v318 = vrot.slane %v173, %v317
    %v319 = vlaneseq
    %v320 = vshrl.u32 %v319, 7
    %v321 = vsub.s32 %v222, %v320
    %v322 = vrot.slane %v174, %v321
    %v323 = vsel %vm227, %v322, %v318
    %v324 = vlaneseq
    %v325 = vshrl.u32 %v324, 7
    %v326 = vsub.s32 %v229, %v325
    %v327 = vrot.slane %v175, %v326
    %v328 = vsel %vm234, %v327, %v323
    %v329 = vlaneseq
    %v330 = vshrl.u32 %v329, 7
    %v331 = vsub.s32 %v236, %v330
    %v332 = vrot.slane %v176, %v331
    %v333 = vsel %vm241, %v332, %v328
    %v334 = vlaneseq
    %v335 = vshrl.u32 %v334, 7
    %v336 = vsub.s32 %v243, %v335
    %v337 = vrot.slane %v177, %v336
    %v338 = vsel %vm248, %v337, %v333
    %v339 = vlaneseq
    %v340 = vshrl.u32 %v339, 7
    %v341 = vsub.s32 %v250, %v340
    %v342 = vrot.slane %v178, %v341
    %v343 = vsel %vm255, %v342, %v338
    %vm344 = vcmask 1041409
    %v345 = vsel %vm344, %v285, %v256
    %vm346 = vcmask 1042434
    %v347 = vsel %vm346, %v314, %v345
    %vm348 = vcmask 1043459
    %v349 = vsel %vm348, %v343, %v347
    %vm350 = vcmask 392192
    %v351 = vsel %vm350, %v349, 0
    %353 = vmatprep.subr.mxu0 0.0
    %354 = vmatpush1.msra.mxu0 0.0
    %355 = vmatprep.subr.mxu0 0.0
    %356 = vmatpush1.msra.mxu0 0.0
    %357 = vmatprep.subr.mxu0 0.0
    %358 = vmatpush1.msra.mxu0 0.0
    %359 = vmatprep.subr.mxu0 0.0
    %360 = vmatpush1.msra.mxu0 0.0
    %361 = vmatprep.subr.mxu0 0.0
    %362 = vmatpush1.msra.mxu0 0.0
    %363 = vmatprep.subr.mxu0 0.0
    %364 = vmatpush1.msra.mxu0 0.0
    %365 = vmatprep.subr.mxu0 0.0
    %366 = vmatpush1.msra.mxu0 0.0
    %367 = vmatprep.subr.mxu0 0.0
    %368 = vmatpush1.msra.mxu0 0.0
    %369 = vmatprep.subr.mxu0 0.0
    %370 = vmatpush1.msra.mxu0 0.0
    %371 = vmatprep.subr.mxu0 0.0
    %372 = vmatpush1.msra.mxu0 0.0
    %373 = vmatprep.subr.mxu0 0.0
    %374 = vmatpush1.msra.mxu0 %v184
    %375 = vmatprep.subr.mxu0 0.0
    %376 = vmatpush1.msra.mxu0 %v183
    %377 = vmatprep.subr.mxu0 0.0
    %378 = vmatpush1.msra.mxu0 %v182
    %379 = vmatprep.subr.mxu0 0.0
    %380 = vmatpush1.msra.mxu0 %v181
    %381 = vmatprep.subr.mxu0 0.0
    %382 = vmatpush1.msra.mxu0 %v180
    %383 = vmatprep.subr.mxu0 0.0
    %384 = vmatpush1.msra.mxu0 %v179
    %385 = vmatprep.subr.mxu0 0.0
    %386 = vmatpush2.msra.mxu0 0.0
    %387 = vmatprep.subr.mxu0 0.0
    %388 = vmatpush2.msra.mxu0 0.0
    %389 = vmatprep.subr.mxu0 0.0
    %390 = vmatpush2.msra.mxu0 0.0
    %391 = vmatprep.subr.mxu0 0.0
    %392 = vmatpush2.msra.mxu0 0.0
    %393 = vmatprep.subr.mxu0 0.0
    %394 = vmatpush2.msra.mxu0 0.0
    %395 = vmatprep.subr.mxu0 0.0
    %396 = vmatpush2.msra.mxu0 0.0
    %397 = vmatprep.subr.mxu0 0.0
    %398 = vmatpush2.msra.mxu0 0.0
    %399 = vmatprep.subr.mxu0 0.0
    %400 = vmatpush2.msra.mxu0 0.0
    %401 = vmatprep.subr.mxu0 0.0
    %402 = vmatpush2.msra.mxu0 0.0
    %403 = vmatprep.subr.mxu0 0.0
    %404 = vmatpush2.msra.mxu0 0.0
    %405 = vmatprep.subr.mxu0 0.0
    %406 = vmatpush2.msra.mxu0 0.0
    %407 = vmatprep.subr.mxu0 0.0
    %408 = vmatpush2.msra.mxu0 0.0
    %409 = vmatprep.subr.mxu0 0.0
    %410 = vmatpush2.msra.mxu0 0.0
    %411 = vmatprep.subr.mxu0 0.0
    %412 = vmatpush2.msra.mxu0 0.0
    %413 = vmatprep.subr.mxu0 0.0
    %414 = vmatpush2.msra.mxu0 0.0
    %415 = vmatprep.subr.mxu0 0.0
    %416 = vmatpush2.msra.mxu0 0.0
    %417 = vmatprep.mubr.f32.mxu0 0.0
    %418 = vmatmul.mubr.f32.gmra.mxu0 %v351
    %v419 = vpop.f32.mrf.mxu0
    %v420 = vadd.f32 %v190, %v419
    %v421 = vpop.f32.mrf.mxu0
    %422 = vdwg.mxu0
    %v423 = vxor.u32 %v420, 2147483648
    %v424 = vmul.f32 %v423, 1.442695
    %v425 = vpow.pop %v424
    %v426 = vadd.f32 %v425, 1.0
    %v427 = vrcp.pop %v426
    %v428 = vmul.f32 1.0, %v427
    %v429 = vmul.f32 %v420, %v428
    %v430 = vld [vmem:[%s3] sm:$0x3]
    %v431 = vld [vmem:[%s4] sm:$0x1]
    %v433 = vlaneseq
    %v434 = vshrl.u32 %v433, 7
    %v435 = vsub.s32 0, %v434
    %v436 = vrot.slane %v431, %v435
    %vm438 = vcmask 15360
    %v440 = vsel %vm438, %v429, 0
    %vm442 = vcmask 1041408
    %v444 = vsel %vm442, %v430, 0
    %446 = vmatprep.subr.mxu0 0.0
    %447 = vmatpush1.msra.mxu0 0.0
    %448 = vmatprep.subr.mxu0 0.0
    %449 = vmatpush1.msra.mxu0 0.0
    %450 = vmatprep.subr.mxu0 0.0
    %451 = vmatpush1.msra.mxu0 0.0
    %452 = vmatprep.subr.mxu0 0.0
    %453 = vmatpush1.msra.mxu0 0.0
    %454 = vmatprep.subr.mxu0 0.0
    %455 = vmatpush1.msra.mxu0 0.0
    %456 = vmatprep.subr.mxu0 0.0
    %457 = vmatpush1.msra.mxu0 0.0
    %458 = vmatprep.subr.mxu0 0.0
    %459 = vmatpush1.msra.mxu0 0.0
    %460 = vmatprep.subr.mxu0 0.0
    %461 = vmatpush1.msra.mxu0 0.0
    %462 = vmatprep.subr.mxu0 0.0
    %463 = vmatpush1.msra.mxu0 0.0
    %464 = vmatprep.subr.mxu0 0.0
    %465 = vmatpush1.msra.mxu0 0.0
    %466 = vmatprep.subr.mxu0 0.0
    %467 = vmatpush1.msra.mxu0 0.0
    %468 = vmatprep.subr.mxu0 0.0
    %469 = vmatpush1.msra.mxu0 0.0
    %470 = vmatprep.subr.mxu0 0.0
    %471 = vmatpush1.msra.mxu0 0.0
    %472 = vmatprep.subr.mxu0 0.0
    %473 = vmatpush1.msra.mxu0 0.0
    %474 = vmatprep.subr.mxu0 0.0
    %475 = vmatpush1.msra.mxu0 0.0
    %476 = vmatprep.subr.mxu0 0.0
    %477 = vmatpush1.msra.mxu0 %v444
    %478 = vmatprep.subr.mxu0 0.0
    %479 = vmatpush2.msra.mxu0 0.0
    %480 = vmatprep.subr.mxu0 0.0
    %481 = vmatpush2.msra.mxu0 0.0
    %482 = vmatprep.subr.mxu0 0.0
    %483 = vmatpush2.msra.mxu0 0.0
    %484 = vmatprep.subr.mxu0 0.0
    %485 = vmatpush2.msra.mxu0 0.0
    %486 = vmatprep.subr.mxu0 0.0
    %487 = vmatpush2.msra.mxu0 0.0
    %488 = vmatprep.subr.mxu0 0.0
    %489 = vmatpush2.msra.mxu0 0.0
    %490 = vmatprep.subr.mxu0 0.0
    %491 = vmatpush2.msra.mxu0 0.0
    %492 = vmatprep.subr.mxu0 0.0
    %493 = vmatpush2.msra.mxu0 0.0
    %494 = vmatprep.subr.mxu0 0.0
    %495 = vmatpush2.msra.mxu0 0.0
    %496 = vmatprep.subr.mxu0 0.0
    %497 = vmatpush2.msra.mxu0 0.0
    %498 = vmatprep.subr.mxu0 0.0
    %499 = vmatpush2.msra.mxu0 0.0
    %500 = vmatprep.subr.mxu0 0.0
    %501 = vmatpush2.msra.mxu0 0.0
    %502 = vmatprep.subr.mxu0 0.0
    %503 = vmatpush2.msra.mxu0 0.0
    %504 = vmatprep.subr.mxu0 0.0
    %505 = vmatpush2.msra.mxu0 0.0
    %506 = vmatprep.subr.mxu0 0.0
    %507 = vmatpush2.msra.mxu0 0.0
    %508 = vmatprep.subr.mxu0 0.0
    %509 = vmatpush2.msra.mxu0 0.0
    %510 = vmatprep.mubr.f32.mxu0 0.0
    %511 = vmatmul.mubr.f32.gmra.mxu0 %v440
    %v512 = vpop.f32.mrf.mxu0
    %v513 = vadd.f32 %v436, %v512
    %v514 = vpop.f32.mrf.mxu0
    %515 = vdwg.mxu0
    %v516 = vxor.u32 %v513, 2147483648
    %v517 = vmul.f32 %v516, 1.442695
    %v518 = vpow.pop %v517
    %v519 = vadd.f32 %v518, 1.0
    %v520 = vrcp.pop %v519
    %v521 = vmul.f32 1.0, %v520
    %v522 = vlaneseq
    %v523 = vshrl.u32 %v522, 7
    %v524 = vsub.s32 0, %v523
    %v525 = vrot.slane %v521, %v524
    %527 = vbcast.lane.b32.xlu0 %v525, 256
    %v528 = vpop.permute.xlu0 %527
    %s530 = sor.u32 256, 8
    %531 = vbcast.lane.b32.xlu0 %v525, %s530
    %v532 = vpop.permute.xlu0 %531
    %s534 = sor.u32 256, 16
    %535 = vbcast.lane.b32.xlu0 %v525, %s534
    %v536 = vpop.permute.xlu0 %535
    %s538 = sor.u32 256, 24
    %539 = vbcast.lane.b32.xlu0 %v525, %s538
    %v540 = vpop.permute.xlu0 %539
    %s542 = sor.u32 256, 32
    %543 = vbcast.lane.b32.xlu0 %v525, %s542
    %v544 = vpop.permute.xlu0 %543
    %s546 = sor.u32 256, 40
    %547 = vbcast.lane.b32.xlu0 %v525, %s546
    %v548 = vpop.permute.xlu0 %547
    %v549 = vlaneseq
    %v550 = vshrl.u32 %v549, 7
    %v551 = vsub.s32 1, %v550
    %v552 = vrot.slane %v521, %v551
    %554 = vbcast.lane.b32.xlu0 %v552, 256
    %v555 = vpop.permute.xlu0 %554
    %s557 = sor.u32 256, 8
    %558 = vbcast.lane.b32.xlu0 %v552, %s557
    %v559 = vpop.permute.xlu0 %558
    %s561 = sor.u32 256, 16
    %562 = vbcast.lane.b32.xlu0 %v552, %s561
    %v563 = vpop.permute.xlu0 %562
    %s565 = sor.u32 256, 24
    %566 = vbcast.lane.b32.xlu0 %v552, %s565
    %v567 = vpop.permute.xlu0 %566
    %s569 = sor.u32 256, 32
    %570 = vbcast.lane.b32.xlu0 %v552, %s569
    %v571 = vpop.permute.xlu0 %570
    %s573 = sor.u32 256, 40
    %574 = vbcast.lane.b32.xlu0 %v552, %s573
    %v575 = vpop.permute.xlu0 %574
    %v576 = vlaneseq
    %v577 = vshrl.u32 %v576, 7
    %v578 = vsub.s32 2, %v577
    %v579 = vrot.slane %v521, %v578
    %581 = vbcast.lane.b32.xlu0 %v579, 256
    %v582 = vpop.permute.xlu0 %581
    %s584 = sor.u32 256, 8
    %585 = vbcast.lane.b32.xlu0 %v579, %s584
    %v586 = vpop.permute.xlu0 %585
    %s588 = sor.u32 256, 16
    %589 = vbcast.lane.b32.xlu0 %v579, %s588
    %v590 = vpop.permute.xlu0 %589
    %s592 = sor.u32 256, 24
    %593 = vbcast.lane.b32.xlu0 %v579, %s592
    %v594 = vpop.permute.xlu0 %593
    %s596 = sor.u32 256, 32
    %597 = vbcast.lane.b32.xlu0 %v579, %s596
    %v598 = vpop.permute.xlu0 %597
    %s600 = sor.u32 256, 40
    %601 = vbcast.lane.b32.xlu0 %v579, %s600
    %v602 = vpop.permute.xlu0 %601
    %v603 = vlaneseq
    %v604 = vshrl.u32 %v603, 7
    %v605 = vsub.s32 3, %v604
    %v606 = vrot.slane %v521, %v605
    %608 = vbcast.lane.b32.xlu0 %v606, 256
    %v609 = vpop.permute.xlu0 %608
    %s611 = sor.u32 256, 8
    %612 = vbcast.lane.b32.xlu0 %v606, %s611
    %v613 = vpop.permute.xlu0 %612
    %s615 = sor.u32 256, 16
    %616 = vbcast.lane.b32.xlu0 %v606, %s615
    %v617 = vpop.permute.xlu0 %616
    %s619 = sor.u32 256, 24
    %620 = vbcast.lane.b32.xlu0 %v606, %s619
    %v621 = vpop.permute.xlu0 %620
    %s623 = sor.u32 256, 32
    %624 = vbcast.lane.b32.xlu0 %v606, %s623
    %v625 = vpop.permute.xlu0 %624
    %s627 = sor.u32 256, 40
    %628 = vbcast.lane.b32.xlu0 %v606, %s627
    %v629 = vpop.permute.xlu0 %628
    %v630 = vmul.f32 %v35, %v528
    %v631 = vmul.f32 %v36, %v528
    %v632 = vmul.f32 %v37, %v532
    %v633 = vmul.f32 %v38, %v532
    %v634 = vmul.f32 %v39, %v536
    %v635 = vmul.f32 %v40, %v536
    %v636 = vmul.f32 %v41, %v540
    %v637 = vmul.f32 %v42, %v540
    %v638 = vmul.f32 %v43, %v544
    %v639 = vmul.f32 %v44, %v544
    %v640 = vmul.f32 %v45, %v548
    %v641 = vmul.f32 %v46, %v548
    %v642 = vmul.f32 %v47, %v555
    %v643 = vmul.f32 %v48, %v555
    %v644 = vmul.f32 %v49, %v559
    %v645 = vmul.f32 %v50, %v559
    %v646 = vmul.f32 %v51, %v563
    %v647 = vmul.f32 %v52, %v563
    %v648 = vmul.f32 %v53, %v567
    %v649 = vmul.f32 %v54, %v567
    %v650 = vmul.f32 %v55, %v571
    %v651 = vmul.f32 %v56, %v571
    %v652 = vmul.f32 %v57, %v575
    %v653 = vmul.f32 %v58, %v575
    %v654 = vmul.f32 %v59, %v582
    %v655 = vmul.f32 %v60, %v582
    %v656 = vmul.f32 %v61, %v586
    %v657 = vmul.f32 %v62, %v586
    %v658 = vmul.f32 %v63, %v590
    %v659 = vmul.f32 %v64, %v590
    %v660 = vmul.f32 %v65, %v594
    %v661 = vmul.f32 %v66, %v594
    %v662 = vmul.f32 %v67, %v598
    %v663 = vmul.f32 %v68, %v598
    %v664 = vmul.f32 %v69, %v602
    %v665 = vmul.f32 %v70, %v602
    %v666 = vmul.f32 %v71, %v609
    %v667 = vmul.f32 %v72, %v609
    %v668 = vmul.f32 %v73, %v613
    %v669 = vmul.f32 %v74, %v613
    %v670 = vmul.f32 %v75, %v617
    %v671 = vmul.f32 %v76, %v617
    %v672 = vmul.f32 %v77, %v621
    %v673 = vmul.f32 %v78, %v621
    %v674 = vmul.f32 %v79, %v625
    %v675 = vmul.f32 %v80, %v625
    %v676 = vmul.f32 %v81, %v629
    %v677 = vmul.f32 %v82, %v629
    %678 = vst [vmem:[#allocation5] sm:$0xff] %v630
    %679 = vst [vmem:[#allocation5 + $0x8] sm:$0xff] %v631
    %680 = vst [vmem:[#allocation5 + $0x10] sm:$0xff] %v632
    %681 = vst [vmem:[#allocation5 + $0x18] sm:$0xff] %v633
    %682 = vst [vmem:[#allocation5 + $0x20] sm:$0xff] %v634
    %683 = vst [vmem:[#allocation5 + $0x28] sm:$0xff] %v635
    %684 = vst [vmem:[#allocation5 + $0x30] sm:$0xff] %v636
    %685 = vst [vmem:[#allocation5 + $0x38] sm:$0xff] %v637
    %686 = vst [vmem:[#allocation5 + $0x40] sm:$0xff] %v638
    %687 = vst [vmem:[#allocation5 + $0x48] sm:$0xff] %v639
    %688 = vst [vmem:[#allocation5 + $0x50] sm:$0xff] %v640
    %689 = vst [vmem:[#allocation5 + $0x58] sm:$0xff] %v641
    %690 = vst [vmem:[#allocation5 + $0x60] sm:$0xff] %v642
    %691 = vst [vmem:[#allocation5 + $0x68] sm:$0xff] %v643
    %692 = vst [vmem:[#allocation5 + $0x70] sm:$0xff] %v644
    %693 = vst [vmem:[#allocation5 + $0x78] sm:$0xff] %v645
    %694 = vst [vmem:[#allocation5 + $0x80] sm:$0xff] %v646
    %695 = vst [vmem:[#allocation5 + $0x88] sm:$0xff] %v647
    %696 = vst [vmem:[#allocation5 + $0x90] sm:$0xff] %v648
    %697 = vst [vmem:[#allocation5 + $0x98] sm:$0xff] %v649
    %698 = vst [vmem:[#allocation5 + $0xa0] sm:$0xff] %v650
    %699 = vst [vmem:[#allocation5 + $0xa8] sm:$0xff] %v651
    %700 = vst [vmem:[#allocation5 + $0xb0] sm:$0xff] %v652
    %701 = vst [vmem:[#allocation5 + $0xb8] sm:$0xff] %v653
    %702 = vst [vmem:[#allocation5 + $0xc0] sm:$0xff] %v654
    %703 = vst [vmem:[#allocation5 + $0xc8] sm:$0xff] %v655
    %704 = vst [vmem:[#allocation5 + $0xd0] sm:$0xff] %v656
    %705 = vst [vmem:[#allocation5 + $0xd8] sm:$0xff] %v657
    %706 = vst [vmem:[#allocation5 + $0xe0] sm:$0xff] %v658
    %707 = vst [vmem:[#allocation5 + $0xe8] sm:$0xff] %v659
    %708 = vst [vmem:[#allocation5 + $0xf0] sm:$0xff] %v660
    %709 = vst [vmem:[#allocation5 + $0xf8] sm:$0xff] %v661
    %710 = vst [vmem:[#allocation5 + $0x100] sm:$0xff] %v662
    %711 = vst [vmem:[#allocation5 + $0x108] sm:$0xff] %v663
    %712 = vst [vmem:[#allocation5 + $0x110] sm:$0xff] %v664
    %713 = vst [vmem:[#allocation5 + $0x118] sm:$0xff] %v665
    %714 = vst [vmem:[#allocation5 + $0x120] sm:$0xff] %v666
    %715 = vst [vmem:[#allocation5 + $0x128] sm:$0xff] %v667
    %716 = vst [vmem:[#allocation5 + $0x130] sm:$0xff] %v668
    %717 = vst [vmem:[#allocation5 + $0x138] sm:$0xff] %v669
    %718 = vst [vmem:[#allocation5 + $0x140] sm:$0xff] %v670
    %719 = vst [vmem:[#allocation5 + $0x148] sm:$0xff] %v671
    %720 = vst [vmem:[#allocation5 + $0x150] sm:$0xff] %v672
    %721 = vst [vmem:[#allocation5 + $0x158] sm:$0xff] %v673
    %722 = vst [vmem:[#allocation5 + $0x160] sm:$0xff] %v674
    %723 = vst [vmem:[#allocation5 + $0x168] sm:$0xff] %v675
    %724 = vst [vmem:[#allocation5 + $0x170] sm:$0xff] %v676
    %725 = vst [vmem:[#allocation5 + $0x178] sm:$0xff] %v677
    // Predicated region
    $region26: #{tpu_custom_call.1} parent=1 // pred_check
      _
    $region27: #{tpu_custom_call.1} parent=1 // pred_check_branch
      %727 = sbr.rel (0) target = $region29
    $region28: #{tpu_custom_call.1} parent=1 // pred_region
      %s729 = ssub.s32 6144, 6144
      %730 = vsyncadd [#allocation4], %s729
      %s731 = sshll.u32 [#allocation5], 4
      %s732 = int_to_ptr.vmem [resolvable:$true] %s731
      %737 = dma.vmem_to_hbm [thread:$0]  %s732, 6144, %s5, [#allocation4], 256, 256, 16
    $region29: #{tpu_custom_call.1} parent=1 // pred_fallthru
      _
    // Predicated region
    $region30: #{tpu_custom_call.1} parent=1 // pred_check
      _
    $region31: #{tpu_custom_call.1} parent=1 // pred_check_branch
      %739 = sbr.rel (0) target = $region33
    $region32: #{tpu_custom_call.1} parent=1 // pred_region
      %740 = dma.done [#allocation4], 6144
    $region33: #{tpu_custom_call.1} parent=1 // pred_fallthru
      _
    %741 = vsyncpa [#allocation3], 1
    %742 = vsyncpa [#allocation4], 1

</llo_original>
